<compile_context>
chip_gen: v7x
topology: tpu7x:2x2x1
jax: 0.10.0
libtpu: 0.0.40
codegen_flags: <defaults>
</compile_context>

<pallas_src>
import math
from functools import partial

import jax
import jax.numpy as jnp
from jax import lax
from jax.experimental import pallas as pl
from jax.experimental.pallas import tpu as pltpu

_MASK_VALUE = -1e30            # finite "-inf" keeps the online-softmax max NaN-free
_LOG2E = math.log2(math.e)
_VMEM_LIMIT = 48 * 1024 * 1024  # above 16/32 MiB defaults, under v7x's 64 MiB


def _min_sublane(dtype) -> int:
    """Minimum second-minor block multiple for this dtype's sublane packing."""
    itemsize = jnp.dtype(dtype).itemsize
    return max(8, 32 // max(itemsize, 1))   # f32: 8, bf16: 16, int8/fp8: 32


def _pick_block(dim: int, target: int, dtype=jnp.float32) -> int:
    """Largest legal tile <= target dividing `dim`; prefers MXU-aligned sizes
    (multiples of 256, then 128), then any multiple of the dtype's sublane
    packing.  Falls back to the full dimension (always legal)."""
    if dim <= target:
        return dim
    sub = _min_sublane(dtype)
    for step in (256, 128, sub):
        start = target - (target % step)
        for cand in range(start, step - 1, -step):
            if cand > 0 and dim % cand == 0:
                return cand
    return dim


def _default_block_target() -> int:
    """Generation-aware default tile target: larger tiles on 128-MiB-VMEM
    parts (v5e/v6e), bounded on v7x (64 MiB per TensorCore)."""
    try:
        vmem = pltpu.get_tpu_info().vmem_capacity_bytes
    except Exception:
        return 256
    return 512 if vmem >= (100 << 20) else 256


# --------------------------------------------------------------------------
# Kernel 1: fused QKV projection, head-major outputs, q pre-scaled by
# log2(e)/sqrt(d_head).
# --------------------------------------------------------------------------
def _qkv_proj_kernel(x_ref, w_in_ref, b_in_ref, q_ref, k_ref, v_ref, *,
                     d_embed: int, n_heads: int, d_head: int, scale: float):
    x = x_ref[0]                                    # (tp, D), native dtype
    # Single big MXU matmul: contraction D, output 3D, f32 accumulation.
    qkv = jnp.dot(x, w_in_ref[...],
                  preferred_element_type=jnp.float32) + b_in_ref[...]
    D = d_embed
    # Head-split fused into the stores: outputs are (B, H, S, d_head), so no
    # extra XLA transpose pass over HBM between the two kernels.
    for h in range(n_heads):
        lo = h * d_head
        q_ref[0, h] = (qkv[:, lo:lo + d_head] * scale).astype(q_ref.dtype)
        k_ref[0, h] = qkv[:, D + lo:D + lo + d_head].astype(k_ref.dtype)
        v_ref[0, h] = qkv[:, 2 * D + lo:2 * D + lo + d_head].astype(v_ref.dtype)


# --------------------------------------------------------------------------
# Kernel 2: flash attention (online softmax, exp2 domain, heads batched)
# + fused single-matmul output projection.
# --------------------------------------------------------------------------
def _flash_attn_kernel(q_ref, k_ref, v_ref, w_out_ref, b_out_ref, o_ref,
                       m_scr, l_scr, acc_scr, proj_scr, *,
                       n_heads: int, d_head: int, tq: int, tk: int,
                       causal_mask: bool):
    qi = pl.program_id(1)
    ki = pl.program_id(2)

    @pl.when(ki == 0)
    def _init():
        m_scr[...] = jnp.full(m_scr.shape, -jnp.inf, jnp.float32)
        l_scr[...] = jnp.zeros(l_scr.shape, jnp.float32)
        acc_scr[...] = jnp.zeros(acc_scr.shape, jnp.float32)

    def _update(apply_mask: bool):
        q = q_ref[0]                                # (H, tq, dh)
        k = k_ref[0]                                # (H, tk, dh)
        v = v_ref[0]                                # (H, tk, dh)

        # q already carries log2(e)/sqrt(d_head), so scores are in the base-2
        # domain and we can use exp2 below.
        s = jnp.einsum('hqd,hkd->hqk', q, k,
                       preferred_element_type=jnp.float32)   # (H, tq, tk)

        if apply_mask:
            # Built only for tiles that cross the diagonal.
            row = qi * tq + lax.broadcasted_iota(jnp.int32, (1, tq, tk), 1)
            col = ki * tk + lax.broadcasted_iota(jnp.int32, (1, tq, tk), 2)
            s = jnp.where(col > row, _MASK_VALUE, s)

        m_prev = m_scr[...]                                   # (H, tq, 1)
        m_new = jnp.maximum(m_prev, s.max(axis=-1, keepdims=True))
        alpha = jnp.exp2(m_prev - m_new)
        p = jnp.exp2(s - m_new)                               # (H, tq, tk)

        l_scr[...] = alpha * l_scr[...] + p.sum(axis=-1, keepdims=True)
        acc_scr[...] = alpha * acc_scr[...] + jnp.einsum(
            'hqk,hkd->hqd', p.astype(v.dtype), v,
            preferred_element_type=jnp.float32)
        m_scr[...] = m_new

    if causal_mask:
        q_start = qi * tq
        k_start = ki * tk
        not_future = k_start <= q_start + (tq - 1)     # tile has visible cols
        crosses_diag = (k_start + tk - 1) > q_start    # tile may need masking

        @pl.when(not_future & crosses_diag)
        def _():
            _update(apply_mask=True)

        @pl.when(not_future & jnp.logical_not(crosses_diag))
        def _():
            _update(apply_mask=False)
    else:
        _update(apply_mask=False)

    @pl.when(ki == pl.num_programs(2) - 1)
    def _finalize():
        # Exact reciprocal on the tiny (H, tq, 1) running sum — negligible
        # cost, keeps parity with the PyTorch module.
        inv_l = 1.0 / l_scr[...]
        attn = acc_scr[...] * inv_l                   # (H, tq, dh) f32

        # Pack heads into one lane-dense (tq, D) slab, then a single K=D
        # output-projection matmul (full MXU systolic depth) instead of
        # n_heads shallow-K matmuls.
        for h in range(n_heads):
            proj_scr[:, h * d_head:(h + 1) * d_head] = attn[h]

        out = jnp.dot(proj_scr[...].astype(w_out_ref.dtype), w_out_ref[...],
                      preferred_element_type=jnp.float32) + b_out_ref[...]
        # One lane-dense (tq, D) store.
        o_ref[0] = out.astype(o_ref.dtype)


# --------------------------------------------------------------------------
# Wrapper
# --------------------------------------------------------------------------
def self_attention(x, w_in, b_in, w_out, b_out, *, n_heads: int,
                   causal_mask: bool = False,
                   q_block=None, kv_block=None, proj_block=None):
    """x: [B, S, D]; w_in: [D, 3D]; b_in: [3D]; w_out: [D, D]; b_out: [D]."""
    B, S, D = x.shape
    assert D % n_heads == 0, "d_embedded must be divisible by n_heads"
    d_head = D // n_heads
    # 1/sqrt(d_head) softmax scale with log2(e) folded in so kernel 2 can use
    # exp2 directly (one fewer VPU multiply per score element).
    scale = _LOG2E / math.sqrt(d_head)

    if q_block is None or kv_block is None or proj_block is None:
        tgt = _default_block_target()
        q_block = q_block if q_block is not None else tgt
        kv_block = kv_block if kv_block is not None else tgt
        proj_block = proj_block if proj_block is not None else tgt

    tp = _pick_block(S, proj_block, x.dtype)
    tq = _pick_block(S, q_block, x.dtype)
    tk = _pick_block(S, kv_block, x.dtype)
    # NOTE(v7x megacore): B * (S // tq) should be >= 2 so both TensorCores get
    # work; with default tiles this holds for any realistic S.

    b_in2 = b_in.reshape(1, 3 * D)
    b_out2 = b_out.reshape(1, D)

    # ---- Kernel 1: QKV projection with fused head-split ----
    head_shape = jax.ShapeDtypeStruct((B, n_heads, S, d_head), x.dtype)
    qkv_out_spec = pl.BlockSpec((1, n_heads, tp, d_head),
                                lambda b, i: (b, 0, i, 0))
    q, k, v = pl.pallas_call(
        partial(_qkv_proj_kernel, d_embed=D, n_heads=n_heads, d_head=d_head,
                scale=scale),
        out_shape=(head_shape, head_shape, head_shape),
        grid_spec=pltpu.PrefetchScalarGridSpec(
            num_scalar_prefetch=0,
            grid=(B, S // tp),
            in_specs=[
                pl.BlockSpec((1, tp, D), lambda b, i: (b, i, 0)),
                # Grid-invariant weights/bias: single-buffered (halves VMEM).
                pl.BlockSpec((D, 3 * D), lambda b, i: (0, 0),
                             pipeline_mode=pl.Buffered(1)),
                pl.BlockSpec((1, 3 * D), lambda b, i: (0, 0),
                             pipeline_mode=pl.Buffered(1)),
            ],
            out_specs=[qkv_out_spec, qkv_out_spec, qkv_out_spec],
        ),
        compiler_params=pltpu.CompilerParams(
            dimension_semantics=("parallel", "parallel"),
            vmem_limit_bytes=_VMEM_LIMIT),
    )(x, w_in, b_in2)

    # ---- Kernel 2: flash attention + output projection ----
    q_spec = pl.BlockSpec((1, n_heads, tq, d_head),
                          lambda b, i, j: (b, 0, i, 0))
    if causal_mask:
        # Clamp fully-future kv steps onto the diagonal tile: the block index
        # repeats, so Pallas skips their HBM DMA (pl.when alone only skips the
        # compute, not the fetch).  The kernel never reads the stale block on
        # those steps.
        def kv_index(b, i, j):
            return (b, 0, jnp.minimum(j, (i * tq + tq - 1) // tk), 0)
    else:
        def kv_index(b, i, j):
            return (b, 0, j, 0)
    kv_spec = pl.BlockSpec((1, n_heads, tk, d_head), kv_index)

    out = pl.pallas_call(
        partial(_flash_attn_kernel, n_heads=n_heads, d_head=d_head,
                tq=tq, tk=tk, causal_mask=causal_mask),
        out_shape=jax.ShapeDtypeStruct((B, S, D), x.dtype),
        grid_spec=pltpu.PrefetchScalarGridSpec(
            num_scalar_prefetch=0,
            grid=(B, S // tq, S // tk),
            in_specs=[
                q_spec, kv_spec, kv_spec,
                pl.BlockSpec((D, D), lambda b, i, j: (0, 0),
                             pipeline_mode=pl.Buffered(1)),
                pl.BlockSpec((1, D), lambda b, i, j: (0, 0),
                             pipeline_mode=pl.Buffered(1)),
            ],
            out_specs=pl.BlockSpec((1, tq, D), lambda b, i, j: (b, i, 0)),
            scratch_shapes=[
                pltpu.VMEM((n_heads, tq, 1), jnp.float32),       # running max
                pltpu.VMEM((n_heads, tq, 1), jnp.float32),       # running sum
                pltpu.VMEM((n_heads, tq, d_head), jnp.float32),  # accumulator
                pltpu.VMEM((tq, D), jnp.float32),                # head-packed
            ],
        ),
        compiler_params=pltpu.CompilerParams(
            dimension_semantics=("parallel", "parallel", "arbitrary"),
            vmem_limit_bytes=_VMEM_LIMIT),
    )(q, k, v, w_out, b_out2)
    return out


# --------------------------------------------------------------------------
# Pure-JAX reference (mirrors the PyTorch forward, incl. causal mask).
# --------------------------------------------------------------------------
def _reference(x, w_in, b_in, w_out, b_out, *, n_heads: int,
               causal_mask: bool = False):
    B, S, D = x.shape
    dh = D // n_heads
    qkv = x @ w_in + b_in
    q, k, v = jnp.split(qkv, 3, axis=-1)
    q = q.reshape(B, S, n_heads, dh).transpose(0, 2, 1, 3)
    k = k.reshape(B, S, n_heads, dh).transpose(0, 2, 1, 3)
    v = v.reshape(B, S, n_heads, dh).transpose(0, 2, 1, 3)
    w = q @ jnp.swapaxes(k, -1, -2)
    if causal_mask:
        mask = jnp.triu(jnp.ones((S, S), dtype=bool), k=1)
        w = jnp.where(mask, -jnp.inf, w)
    w = w / math.sqrt(dh)
    w = jax.nn.softmax(w, axis=-1)
    out = w @ v
    out = out.transpose(0, 2, 1, 3).reshape(B, S, D)
    return out @ w_out + b_out


if __name__ == "__main__":
    B, S, D = 2, 16, 32
    n_heads = 4

    key = jax.random.PRNGKey(0)
    kx, kw1, kb1, kw2, kb2 = jax.random.split(key, 5)

    x = jax.random.normal(kx, (B, S, D), dtype=jnp.float32)
    # Synthetic parameters, stored as [in, out] (transpose of nn.Linear.weight).
    w_in = jax.random.normal(kw1, (D, 3 * D), dtype=jnp.float32) * 0.05
    b_in = jax.random.normal(kb1, (3 * D,), dtype=jnp.float32) * 0.05
    w_out = jax.random.normal(kw2, (D, D), dtype=jnp.float32) * 0.05
    b_out = jax.random.normal(kb2, (D,), dtype=jnp.float32) * 0.05

    ref = _reference(x, w_in, b_in, w_out, b_out, n_heads=n_heads)
    ref_c = _reference(x, w_in, b_in, w_out, b_out, n_heads=n_heads,
                       causal_mask=True)

    # Small blocks so the online-softmax kv loop is actually exercised
    # (grid = (2, 2, 2) for the attention kernel).
    out = self_attention(x, w_in, b_in, w_out, b_out, n_heads=n_heads,
                         q_block=8, kv_block=8, proj_block=8)
    out = jax.block_until_ready(out)
    assert out.shape == (B, S, D)
    assert jnp.allclose(out, ref, atol=1e-3, rtol=1e-3), "non-causal mismatch"

    out_c = self_attention(x, w_in, b_in, w_out, b_out, n_heads=n_heads,
                           causal_mask=True, q_block=8, kv_block=8,
                           proj_block=8)
    out_c = jax.block_until_ready(out_c)
    assert jnp.allclose(out_c, ref_c, atol=1e-3, rtol=1e-3), "causal mismatch"

    # Also exercise the generation-aware default tile sizes (single-tile path).
    out_d = self_attention(x, w_in, b_in, w_out, b_out, n_heads=n_heads)
    out_d = jax.block_until_ready(out_d)
    assert jnp.allclose(out_d, ref, atol=1e-3, rtol=1e-3), "default-tile mismatch"

    print("KERNEL_OK")
</pallas_src>

<mosaic_0001>
module attributes {stable_mosaic.version = 11 : i64} {
  func.func @_qkv_proj_kernel(%arg0: i32, %arg1: i32, %arg2: memref<1x8x32xf32, #tpu.memory_space<vmem>>, %arg3: memref<32x96xf32, #tpu.memory_space<vmem>>, %arg4: memref<1x96xf32, #tpu.memory_space<vmem>>, %arg5: memref<1x4x8x8xf32, #tpu.memory_space<vmem>>, %arg6: memref<1x4x8x8xf32, #tpu.memory_space<vmem>>, %arg7: memref<1x4x8x8xf32, #tpu.memory_space<vmem>>) attributes {dimension_semantics = [#tpu.dimension_semantics<parallel>, #tpu.dimension_semantics<parallel>], iteration_bounds = array<i64: 2, 2>, scalar_prefetch = 0 : i64, scratch_operands = 0 : i64, tpu.core_type = #tpu.core_type<tc>, window_params = [{transform_indices = @transform_0, window_bounds = array<i64: 1, 8, 32>}, {pipeline_mode = #tpu.pipeline_mode<synchronous>, transform_indices = @transform_1, window_bounds = array<i64: 32, 96>}, {pipeline_mode = #tpu.pipeline_mode<synchronous>, transform_indices = @transform_2, window_bounds = array<i64: 1, 96>}, {transform_indices = @transform_3, window_bounds = array<i64: 1, 4, 8, 8>}, {transform_indices = @transform_4, window_bounds = array<i64: 1, 4, 8, 8>}, {transform_indices = @transform_5, window_bounds = array<i64: 1, 4, 8, 8>}]} {
    %c0 = arith.constant 0 : index
    %c0_0 = arith.constant 0 : index
    %c0_1 = arith.constant 0 : index
    %0 = vector.load %arg2[%c0, %c0_0, %c0_1] : memref<1x8x32xf32, #tpu.memory_space<vmem>>, vector<1x8x32xf32>
    %1 = vector.shape_cast %0 : vector<1x8x32xf32> to vector<8x32xf32>
    %c0_2 = arith.constant 0 : index
    %c0_3 = arith.constant 0 : index
    %2 = vector.load %arg3[%c0_2, %c0_3] : memref<32x96xf32, #tpu.memory_space<vmem>>, vector<32x96xf32>
    %cst = arith.constant dense<0.000000e+00> : vector<8x96xf32>
    %3 = tpu.matmul %1, %2, %cst {dimension_numbers = #tpu.dot_dimension_numbers<[1], [0], [0], [1], [0, 0, 1, 1], [], []>} : vector<8x32xf32>, vector<32x96xf32>, vector<8x96xf32> -> vector<8x96xf32>
    %c0_4 = arith.constant 0 : index
    %c0_5 = arith.constant 0 : index
    %4 = vector.load %arg4[%c0_4, %c0_5] : memref<1x96xf32, #tpu.memory_space<vmem>>, vector<1x96xf32>
    %5 = vector.broadcast %4 : vector<1x96xf32> to vector<8x96xf32>
    %6 = arith.addf %3, %5 : vector<8x96xf32>
    %7 = vector.extract_strided_slice %6 {offsets = [0, 0], sizes = [8, 8], strides = [1, 1]} : vector<8x96xf32> to vector<8x8xf32>
    %cst_6 = arith.constant 0.510069728 : f32
    %8 = vector.broadcast %cst_6 : f32 to vector<8x8xf32>
    %9 = arith.mulf %7, %8 : vector<8x8xf32>
    %c0_7 = arith.constant 0 : index
    %c0_8 = arith.constant 0 : index
    %c0_9 = arith.constant 0 : index
    %c0_10 = arith.constant 0 : index
    %10 = vector.load %arg5[%c0_7, %c0_8, %c0_9, %c0_10] : memref<1x4x8x8xf32, #tpu.memory_space<vmem>>, vector<1x1x8x8xf32>
    %11 = vector.shape_cast %10 : vector<1x1x8x8xf32> to vector<8x8xf32>
    %12 = vector.shape_cast %9 : vector<8x8xf32> to vector<1x1x8x8xf32>
    tpu.vector_store %arg5[%c0_7, %c0_8, %c0_9, %c0_10], %12 {strides = array<i32>} : memref<1x4x8x8xf32, #tpu.memory_space<vmem>>, vector<1x1x8x8xf32>,
    %13 = vector.extract_strided_slice %6 {offsets = [0, 32], sizes = [8, 8], strides = [1, 1]} : vector<8x96xf32> to vector<8x8xf32>
    %c0_11 = arith.constant 0 : index
    %c0_12 = arith.constant 0 : index
    %c0_13 = arith.constant 0 : index
    %c0_14 = arith.constant 0 : index
    %14 = vector.load %arg6[%c0_11, %c0_12, %c0_13, %c0_14] : memref<1x4x8x8xf32, #tpu.memory_space<vmem>>, vector<1x1x8x8xf32>
    %15 = vector.shape_cast %14 : vector<1x1x8x8xf32> to vector<8x8xf32>
    %16 = vector.shape_cast %13 : vector<8x8xf32> to vector<1x1x8x8xf32>
    tpu.vector_store %arg6[%c0_11, %c0_12, %c0_13, %c0_14], %16 {strides = array<i32>} : memref<1x4x8x8xf32, #tpu.memory_space<vmem>>, vector<1x1x8x8xf32>,
    %17 = vector.extract_strided_slice %6 {offsets = [0, 64], sizes = [8, 8], strides = [1, 1]} : vector<8x96xf32> to vector<8x8xf32>
    %c0_15 = arith.constant 0 : index
    %c0_16 = arith.constant 0 : index
    %c0_17 = arith.constant 0 : index
    %c0_18 = arith.constant 0 : index
    %18 = vector.load %arg7[%c0_15, %c0_16, %c0_17, %c0_18] : memref<1x4x8x8xf32, #tpu.memory_space<vmem>>, vector<1x1x8x8xf32>
    %19 = vector.shape_cast %18 : vector<1x1x8x8xf32> to vector<8x8xf32>
    %20 = vector.shape_cast %17 : vector<8x8xf32> to vector<1x1x8x8xf32>
    tpu.vector_store %arg7[%c0_15, %c0_16, %c0_17, %c0_18], %20 {strides = array<i32>} : memref<1x4x8x8xf32, #tpu.memory_space<vmem>>, vector<1x1x8x8xf32>,
    %21 = vector.extract_strided_slice %6 {offsets = [0, 8], sizes = [8, 8], strides = [1, 1]} : vector<8x96xf32> to vector<8x8xf32>
    %cst_19 = arith.constant 0.510069728 : f32
    %22 = vector.broadcast %cst_19 : f32 to vector<8x8xf32>
    %23 = arith.mulf %21, %22 : vector<8x8xf32>
    %c0_20 = arith.constant 0 : index
    %c1 = arith.constant 1 : index
    %c0_21 = arith.constant 0 : index
    %c0_22 = arith.constant 0 : index
    %24 = vector.load %arg5[%c0_20, %c1, %c0_21, %c0_22] : memref<1x4x8x8xf32, #tpu.memory_space<vmem>>, vector<1x1x8x8xf32>
    %25 = vector.shape_cast %24 : vector<1x1x8x8xf32> to vector<8x8xf32>
    %26 = vector.shape_cast %23 : vector<8x8xf32> to vector<1x1x8x8xf32>
    tpu.vector_store %arg5[%c0_20, %c1, %c0_21, %c0_22], %26 {strides = array<i32>} : memref<1x4x8x8xf32, #tpu.memory_space<vmem>>, vector<1x1x8x8xf32>,
    %27 = vector.extract_strided_slice %6 {offsets = [0, 40], sizes = [8, 8], strides = [1, 1]} : vector<8x96xf32> to vector<8x8xf32>
    %c0_23 = arith.constant 0 : index
    %c1_24 = arith.constant 1 : index
    %c0_25 = arith.constant 0 : index
    %c0_26 = arith.constant 0 : index
    %28 = vector.load %arg6[%c0_23, %c1_24, %c0_25, %c0_26] : memref<1x4x8x8xf32, #tpu.memory_space<vmem>>, vector<1x1x8x8xf32>
    %29 = vector.shape_cast %28 : vector<1x1x8x8xf32> to vector<8x8xf32>
    %30 = vector.shape_cast %27 : vector<8x8xf32> to vector<1x1x8x8xf32>
    tpu.vector_store %arg6[%c0_23, %c1_24, %c0_25, %c0_26], %30 {strides = array<i32>} : memref<1x4x8x8xf32, #tpu.memory_space<vmem>>, vector<1x1x8x8xf32>,
    %31 = vector.extract_strided_slice %6 {offsets = [0, 72], sizes = [8, 8], strides = [1, 1]} : vector<8x96xf32> to vector<8x8xf32>
    %c0_27 = arith.constant 0 : index
    %c1_28 = arith.constant 1 : index
    %c0_29 = arith.constant 0 : index
    %c0_30 = arith.constant 0 : index
    %32 = vector.load %arg7[%c0_27, %c1_28, %c0_29, %c0_30] : memref<1x4x8x8xf32, #tpu.memory_space<vmem>>, vector<1x1x8x8xf32>
    %33 = vector.shape_cast %32 : vector<1x1x8x8xf32> to vector<8x8xf32>
    %34 = vector.shape_cast %31 : vector<8x8xf32> to vector<1x1x8x8xf32>
    tpu.vector_store %arg7[%c0_27, %c1_28, %c0_29, %c0_30], %34 {strides = array<i32>} : memref<1x4x8x8xf32, #tpu.memory_space<vmem>>, vector<1x1x8x8xf32>,
    %35 = vector.extract_strided_slice %6 {offsets = [0, 16], sizes = [8, 8], strides = [1, 1]} : vector<8x96xf32> to vector<8x8xf32>
    %cst_31 = arith.constant 0.510069728 : f32
    %36 = vector.broadcast %cst_31 : f32 to vector<8x8xf32>
    %37 = arith.mulf %35, %36 : vector<8x8xf32>
    %c0_32 = arith.constant 0 : index
    %c2 = arith.constant 2 : index
    %c0_33 = arith.constant 0 : index
    %c0_34 = arith.constant 0 : index
    %38 = vector.load %arg5[%c0_32, %c2, %c0_33, %c0_34] : memref<1x4x8x8xf32, #tpu.memory_space<vmem>>, vector<1x1x8x8xf32>
    %39 = vector.shape_cast %38 : vector<1x1x8x8xf32> to vector<8x8xf32>
    %40 = vector.shape_cast %37 : vector<8x8xf32> to vector<1x1x8x8xf32>
    tpu.vector_store %arg5[%c0_32, %c2, %c0_33, %c0_34], %40 {strides = array<i32>} : memref<1x4x8x8xf32, #tpu.memory_space<vmem>>, vector<1x1x8x8xf32>,
    %41 = vector.extract_strided_slice %6 {offsets = [0, 48], sizes = [8, 8], strides = [1, 1]} : vector<8x96xf32> to vector<8x8xf32>
    %c0_35 = arith.constant 0 : index
    %c2_36 = arith.constant 2 : index
    %c0_37 = arith.constant 0 : index
    %c0_38 = arith.constant 0 : index
    %42 = vector.load %arg6[%c0_35, %c2_36, %c0_37, %c0_38] : memref<1x4x8x8xf32, #tpu.memory_space<vmem>>, vector<1x1x8x8xf32>
    %43 = vector.shape_cast %42 : vector<1x1x8x8xf32> to vector<8x8xf32>
    %44 = vector.shape_cast %41 : vector<8x8xf32> to vector<1x1x8x8xf32>
    tpu.vector_store %arg6[%c0_35, %c2_36, %c0_37, %c0_38], %44 {strides = array<i32>} : memref<1x4x8x8xf32, #tpu.memory_space<vmem>>, vector<1x1x8x8xf32>,
    %45 = vector.extract_strided_slice %6 {offsets = [0, 80], sizes = [8, 8], strides = [1, 1]} : vector<8x96xf32> to vector<8x8xf32>
    %c0_39 = arith.constant 0 : index
    %c2_40 = arith.constant 2 : index
    %c0_41 = arith.constant 0 : index
    %c0_42 = arith.constant 0 : index
    %46 = vector.load %arg7[%c0_39, %c2_40, %c0_41, %c0_42] : memref<1x4x8x8xf32, #tpu.memory_space<vmem>>, vector<1x1x8x8xf32>
    %47 = vector.shape_cast %46 : vector<1x1x8x8xf32> to vector<8x8xf32>
    %48 = vector.shape_cast %45 : vector<8x8xf32> to vector<1x1x8x8xf32>
    tpu.vector_store %arg7[%c0_39, %c2_40, %c0_41, %c0_42], %48 {strides = array<i32>} : memref<1x4x8x8xf32, #tpu.memory_space<vmem>>, vector<1x1x8x8xf32>,
    %49 = vector.extract_strided_slice %6 {offsets = [0, 24], sizes = [8, 8], strides = [1, 1]} : vector<8x96xf32> to vector<8x8xf32>
    %cst_43 = arith.constant 0.510069728 : f32
    %50 = vector.broadcast %cst_43 : f32 to vector<8x8xf32>
    %51 = arith.mulf %49, %50 : vector<8x8xf32>
    %c0_44 = arith.constant 0 : index
    %c3 = arith.constant 3 : index
    %c0_45 = arith.constant 0 : index
    %c0_46 = arith.constant 0 : index
    %52 = vector.load %arg5[%c0_44, %c3, %c0_45, %c0_46] : memref<1x4x8x8xf32, #tpu.memory_space<vmem>>, vector<1x1x8x8xf32>
    %53 = vector.shape_cast %52 : vector<1x1x8x8xf32> to vector<8x8xf32>
    %54 = vector.shape_cast %51 : vector<8x8xf32> to vector<1x1x8x8xf32>
    tpu.vector_store %arg5[%c0_44, %c3, %c0_45, %c0_46], %54 {strides = array<i32>} : memref<1x4x8x8xf32, #tpu.memory_space<vmem>>, vector<1x1x8x8xf32>,
    %55 = vector.extract_strided_slice %6 {offsets = [0, 56], sizes = [8, 8], strides = [1, 1]} : vector<8x96xf32> to vector<8x8xf32>
    %c0_47 = arith.constant 0 : index
    %c3_48 = arith.constant 3 : index
    %c0_49 = arith.constant 0 : index
    %c0_50 = arith.constant 0 : index
    %56 = vector.load %arg6[%c0_47, %c3_48, %c0_49, %c0_50] : memref<1x4x8x8xf32, #tpu.memory_space<vmem>>, vector<1x1x8x8xf32>
    %57 = vector.shape_cast %56 : vector<1x1x8x8xf32> to vector<8x8xf32>
    %58 = vector.shape_cast %55 : vector<8x8xf32> to vector<1x1x8x8xf32>
    tpu.vector_store %arg6[%c0_47, %c3_48, %c0_49, %c0_50], %58 {strides = array<i32>} : memref<1x4x8x8xf32, #tpu.memory_space<vmem>>, vector<1x1x8x8xf32>,
    %59 = vector.extract_strided_slice %6 {offsets = [0, 88], sizes = [8, 8], strides = [1, 1]} : vector<8x96xf32> to vector<8x8xf32>
    %c0_51 = arith.constant 0 : index
    %c3_52 = arith.constant 3 : index
    %c0_53 = arith.constant 0 : index
    %c0_54 = arith.constant 0 : index
    %60 = vector.load %arg7[%c0_51, %c3_52, %c0_53, %c0_54] : memref<1x4x8x8xf32, #tpu.memory_space<vmem>>, vector<1x1x8x8xf32>
    %61 = vector.shape_cast %60 : vector<1x1x8x8xf32> to vector<8x8xf32>
    %62 = vector.shape_cast %59 : vector<8x8xf32> to vector<1x1x8x8xf32>
    tpu.vector_store %arg7[%c0_51, %c3_52, %c0_53, %c0_54], %62 {strides = array<i32>} : memref<1x4x8x8xf32, #tpu.memory_space<vmem>>, vector<1x1x8x8xf32>,
    return
  }
  func.func @transform_0(%arg0: i32, %arg1: i32) -> (i32, i32, i32) {
    %c0_i32 = arith.constant 0 : i32
    %c0_i32_0 = arith.constant 0 : i32
    return %arg0, %arg1, %c0_i32 : i32, i32, i32
  }
  func.func @transform_1(%arg0: i32, %arg1: i32) -> (i32, i32) {
    %c0_i32 = arith.constant 0 : i32
    %c0_i32_0 = arith.constant 0 : i32
    %c0_i32_1 = arith.constant 0 : i32
    return %c0_i32, %c0_i32_0 : i32, i32
  }
  func.func @transform_2(%arg0: i32, %arg1: i32) -> (i32, i32) {
    %c0_i32 = arith.constant 0 : i32
    %c0_i32_0 = arith.constant 0 : i32
    %c0_i32_1 = arith.constant 0 : i32
    return %c0_i32, %c0_i32_0 : i32, i32
  }
  func.func @transform_3(%arg0: i32, %arg1: i32) -> (i32, i32, i32, i32) {
    %c0_i32 = arith.constant 0 : i32
    %c0_i32_0 = arith.constant 0 : i32
    %c0_i32_1 = arith.constant 0 : i32
    return %arg0, %c0_i32, %arg1, %c0_i32_0 : i32, i32, i32, i32
  }
  func.func @transform_4(%arg0: i32, %arg1: i32) -> (i32, i32, i32, i32) {
    %c0_i32 = arith.constant 0 : i32
    %c0_i32_0 = arith.constant 0 : i32
    %c0_i32_1 = arith.constant 0 : i32
    return %arg0, %c0_i32, %arg1, %c0_i32_0 : i32, i32, i32, i32
  }
  func.func @transform_5(%arg0: i32, %arg1: i32) -> (i32, i32, i32, i32) {
    %c0_i32 = arith.constant 0 : i32
    %c0_i32_0 = arith.constant 0 : i32
    %c0_i32_1 = arith.constant 0 : i32
    return %arg0, %c0_i32, %arg1, %c0_i32_0 : i32, i32, i32, i32
  }
}

</mosaic_0001>

<llo_original>
// kernel: tpu_custom_call.1
$region0: #{tpu_custom_call.1}
  #allocation0 [shape = 'u32[]', space=smem, size = 0x4, offset = 0x4, fixed_abs, tag = 'smem constant byte address 0x4 - core index']
  #allocation1 [shape = 'u32[144,128]{1,0:T(1,128)}', space=vmem, size = 0x12000, scoped, tag = 'internal scratch']
  %s0 = inlined_call_operand.hbm [shape: f32[2,16,32], index: 0, kind: input, shape index: {}]
  %s1 = inlined_call_operand.hbm [shape: f32[32,96], index: 1, kind: input, shape index: {}]
  %s2 = inlined_call_operand.vmem [shape: f32[1,96], index: 2, kind: input, shape index: {}]
  %s3 = inlined_call_operand.vmem [shape: f32[2,4,16,8], index: 3, kind: output, shape index: {0}]
  %s4 = inlined_call_operand.vmem [shape: f32[2,4,16,8], index: 4, kind: output, shape index: {1}]
  %s5 = inlined_call_operand.vmem [shape: f32[2,4,16,8], index: 5, kind: output, shape index: {2}]
  %6 = xla_tuple %s3, %s4, %s5
  %s7 = sld [smem:[#allocation0]]
  $region171: #{tpu_custom_call.1} parent=0
    _
  %s9 = ssub.s32 1, %s7
  %s10 = scalar_select 0, %s9, %s7
  $region1: #{tpu_custom_call.1} parent=0
    #allocation2 [shape = 'u8[8192]{0}', space=vmem, size = 0x2000, scoped, tag = 'input window, operand 0']
    #allocation3 [shape = 's32[2]{0}', space=sflag, size = 0x8, scoped, tag = 'scoped memory for tpu_custom_call.1']
    #allocation4 [shape = 'u8[16384]{0}', space=vmem, size = 0x4000, scoped, tag = 'input window, operand 1, single buffered']
    #allocation5 [shape = 's32[1]{0}', space=sflag, size = 0x4, scoped, tag = 'scoped memory for tpu_custom_call.1']
    #allocation6 [shape = 'u8[32768]{0}', space=vmem, size = 0x8000, scoped, tag = 'output window, operand 0']
    #allocation7 [shape = 'u8[32768]{0}', space=vmem, size = 0x8000, scoped, tag = 'output window, operand 1']
    #allocation8 [shape = 'u8[32768]{0}', space=vmem, size = 0x8000, scoped, tag = 'output window, operand 2']
    %11 = vsyncpa [#allocation3], 0
    %s12 = scalar_lea.sflag [#allocation3], 1
    %13 = vsyncpa %s12, 0
    %14 = vsyncpa [#allocation5], 0
    loop: start=0, step=1, limit=6
    $region2: #{tpu_custom_call.1} parent=1 // loop_pre_header
      _
    $region3: #{tpu_custom_call.1} parent=1 // loop_header
      %s16 = sphi 0, %s20
      %p17 = scmp.ge.s32.totalorder %s16, 6
      %s23 = sphi 0, %s35
      %s24 = sphi 0, %s31
      %s25 = sphi 0, %s23
      %s26 = sphi 0, %s24
      %s27 = sphi 0, %s25
      %s28 = sphi 0, %s26
      %s40 = sphi 0, %s42
      %s43 = sphi 0, %s40
      %s44 = sphi 0, %s43
      %s60 = sphi 0, %s44
      %s64 = sphi 0, %s64
      %s66 = sphi 0, %s64
      %s67 = sphi 0, %s66
      %s81 = sphi 0, %s67
      %s85 = sphi 0, %s85
      %s87 = sphi 0, %s85
      %s88 = sphi 0, %s87
      %s102 = sphi 0, %s88
      %s110 = sphi 0, %s112
      %s113 = sphi 0, %s110
      %s114 = sphi 0, %s113
      %s130 = sphi 0, %s114
      %s138 = sphi 0, %s140
      %s141 = sphi 0, %s138
      %s142 = sphi 0, %s141
      %s158 = sphi 0, %s142
      %s166 = sphi 0, %s168
      %s169 = sphi 0, %s166
      %s170 = sphi 0, %s169
      %s186 = sphi 0, %s170
    $region4: #{tpu_custom_call.1} parent=1 // loop_header_branch
      %19 = sbr.rel (%p17) target = $region8
    $region5: #{tpu_custom_call.1} parent=1 // loop_body
      %s21 = ssub.s32 %s16, 1
      %s22 = ssub.s32 %s16, 2
      %s29 = sadd.s32 1, %s24
      %p30 = scmp.ge.s32.totalorder %s29, 2
      %s31 = scalar_select %p30, 0, %s29
      %s32 = sadd.s32 1, %s23
      %s33 = scalar_select %p30, %s32, %s23
      %p34 = scmp.ge.s32.totalorder %s33, 2
      %s35 = scalar_select %p34, 0, %s33
      %s36 = ssub.s32 %s23, %s35
      %s37 = ssub.s32 %s24, %s31
      %s38 = sor.u32 %s36, %s37
      %p39 = scmp.eq.s32.totalorder %s38, 0
      %s41 = sadd.s32 %s40, 1
      %s42 = scalar_select %p39, %s40, %s41
      %p45 = pneg %p39
      %p46 = scmp.eq.s32.totalorder %s16, 3
      %p47 = por %p45, %p46
      %p48 = scmp.ne.s32.totalorder %s40, %s43
      %p49 = scmp.eq.s32.totalorder %s16, 0
      %p50 = por %p48, %p49
      %p51 = scmp.ne.s32.totalorder %s40, %s43
      %p52 = scmp.eq.s32.totalorder %s21, 3
      %p53 = por %p51, %p52
      %p54 = scmp.ne.s32.totalorder %s43, %s44
      %p55 = scmp.eq.s32.totalorder %s21, 0
      %p56 = por %p54, %p55
      %p57 = scmp.ne.s32.totalorder %s43, %s44
      %p58 = scmp.eq.s32.totalorder %s22, 3
      %p59 = por %p57, %p58
      %p61 = scmp.ne.s32.totalorder %s44, %s60
      %p62 = scmp.eq.s32.totalorder %s22, 0
      %p63 = por %p61, %p62
      %s65 = sadd.s32 %s64, 1
      %p68 = scmp.eq.s32.totalorder %s16, 3
      %p69 = scmp.ne.s32.totalorder %s64, %s66
      %p70 = scmp.eq.s32.totalorder %s16, 0
      %p71 = por %p69, %p70
      %p72 = scmp.ne.s32.totalorder %s64, %s66
      %p73 = scmp.eq.s32.totalorder %s21, 3
      %p74 = por %p72, %p73
      %p75 = scmp.ne.s32.totalorder %s66, %s67
      %p76 = scmp.eq.s32.totalorder %s21, 0
      %p77 = por %p75, %p76
      %p78 = scmp.ne.s32.totalorder %s66, %s67
      %p79 = scmp.eq.s32.totalorder %s22, 3
      %p80 = por %p78, %p79
      %p82 = scmp.ne.s32.totalorder %s67, %s81
      %p83 = scmp.eq.s32.totalorder %s22, 0
      %p84 = por %p82, %p83
      %s86 = sadd.s32 %s85, 1
      %p89 = scmp.eq.s32.totalorder %s16, 3
      %p90 = scmp.ne.s32.totalorder %s85, %s87
      %p91 = scmp.eq.s32.totalorder %s16, 0
      %p92 = por %p90, %p91
      %p93 = scmp.ne.s32.totalorder %s85, %s87
      %p94 = scmp.eq.s32.totalorder %s21, 3
      %p95 = por %p93, %p94
      %p96 = scmp.ne.s32.totalorder %s87, %s88
      %p97 = scmp.eq.s32.totalorder %s21, 0
      %p98 = por %p96, %p97
      %p99 = scmp.ne.s32.totalorder %s87, %s88
      %p100 = scmp.eq.s32.totalorder %s22, 3
      %p101 = por %p99, %p100
      %p103 = scmp.ne.s32.totalorder %s88, %s102
      %p104 = scmp.eq.s32.totalorder %s22, 0
      %p105 = por %p103, %p104
      %s106 = ssub.s32 %s23, %s35
      %s107 = ssub.s32 %s24, %s31
      %s108 = sor.u32 %s106, %s107
      %p109 = scmp.eq.s32.totalorder %s108, 0
      %s111 = sadd.s32 %s110, 1
      %s112 = scalar_select %p109, %s110, %s111
      %p115 = pneg %p109
      %p116 = scmp.eq.s32.totalorder %s16, 3
      %p117 = por %p115, %p116
      %p118 = scmp.ne.s32.totalorder %s110, %s113
      %p119 = scmp.eq.s32.totalorder %s16, 0
      %p120 = por %p118, %p119
      %p121 = scmp.ne.s32.totalorder %s110, %s113
      %p122 = scmp.eq.s32.totalorder %s21, 3
      %p123 = por %p121, %p122
      %p124 = scmp.ne.s32.totalorder %s113, %s114
      %p125 = scmp.eq.s32.totalorder %s21, 0
      %p126 = por %p124, %p125
      %p127 = scmp.ne.s32.totalorder %s113, %s114
      %p128 = scmp.eq.s32.totalorder %s22, 3
      %p129 = por %p127, %p128
      %p131 = scmp.ne.s32.totalorder %s114, %s130
      %p132 = scmp.eq.s32.totalorder %s22, 0
      %p133 = por %p131, %p132
      %s134 = ssub.s32 %s23, %s35
      %s135 = ssub.s32 %s24, %s31
      %s136 = sor.u32 %s134, %s135
      %p137 = scmp.eq.s32.totalorder %s136, 0
      %s139 = sadd.s32 %s138, 1
      %s140 = scalar_select %p137, %s138, %s139
      %p143 = pneg %p137
      %p144 = scmp.eq.s32.totalorder %s16, 3
      %p145 = por %p143, %p144
      %p146 = scmp.ne.s32.totalorder %s138, %s141
      %p147 = scmp.eq.s32.totalorder %s16, 0
      %p148 = por %p146, %p147
      %p149 = scmp.ne.s32.totalorder %s138, %s141
      %p150 = scmp.eq.s32.totalorder %s21, 3
      %p151 = por %p149, %p150
      %p152 = scmp.ne.s32.totalorder %s141, %s142
      %p153 = scmp.eq.s32.totalorder %s21, 0
      %p154 = por %p152, %p153
      %p155 = scmp.ne.s32.totalorder %s141, %s142
      %p156 = scmp.eq.s32.totalorder %s22, 3
      %p157 = por %p155, %p156
      %p159 = scmp.ne.s32.totalorder %s142, %s158
      %p160 = scmp.eq.s32.totalorder %s22, 0
      %p161 = por %p159, %p160
      %s162 = ssub.s32 %s23, %s35
      %s163 = ssub.s32 %s24, %s31
      %s164 = sor.u32 %s162, %s163
      %p165 = scmp.eq.s32.totalorder %s164, 0
      %s167 = sadd.s32 %s166, 1
      %s168 = scalar_select %p165, %s166, %s167
      %p171 = pneg %p165
      %p172 = scmp.eq.s32.totalorder %s16, 3
      %p173 = por %p171, %p172
      %p174 = scmp.ne.s32.totalorder %s166, %s169
      %p175 = scmp.eq.s32.totalorder %s16, 0
      %p176 = por %p174, %p175
      %p177 = scmp.ne.s32.totalorder %s166, %s169
      %p178 = scmp.eq.s32.totalorder %s21, 3
      %p179 = por %p177, %p178
      %p180 = scmp.ne.s32.totalorder %s169, %s170
      %p181 = scmp.eq.s32.totalorder %s21, 0
      %p182 = por %p180, %p181
      %p183 = scmp.ne.s32.totalorder %s169, %s170
      %p184 = scmp.eq.s32.totalorder %s22, 3
      %p185 = por %p183, %p184
      %p187 = scmp.ne.s32.totalorder %s170, %s186
      %p188 = scmp.eq.s32.totalorder %s22, 0
      %p189 = por %p187, %p188
      %p190 = scmp.le.s32.totalorder 1, %s16
      %p191 = scmp.lt.s32.totalorder %s16, 5
      %p192 = pnand %p190, %p191
      %p193 = pneg %p192
      // Predicated region
      $region9: #{tpu_custom_call.1} parent=5 // pred_check
        _
      $region10: #{tpu_custom_call.1} parent=5 // pred_check_branch
        %195 = sbr.rel (%p192) target = $region12
      $region11: #{tpu_custom_call.1} parent=5 // pred_region
        %s196 = ssub.s32 %s16, 1
        // Predicated region
        $region13: #{tpu_custom_call.1} parent=11 // pred_check
          %p197 = pneg %p77
        $region14: #{tpu_custom_call.1} parent=11 // pred_check_branch
          %199 = sbr.rel (%p197) target = $region16
        $region15: #{tpu_custom_call.1} parent=11 // pred_region
          %s201 = ssub.s32 512, 512
          %202 = vsyncadd [#allocation5], %s201
          %s203 = sshll.u32 [#allocation4], 4
          %s204 = int_to_ptr.vmem [resolvable:$true] %s203
          %209 = dma.hbm_to_vmem [thread:$0]  %s1, 512, %s204, [#allocation5], 128, 128, 8
        $region16: #{tpu_custom_call.1} parent=11 // pred_fallthru
          _
        // Predicated region
        $region17: #{tpu_custom_call.1} parent=11 // pred_check
          %p210 = pneg %p98
        $region18: #{tpu_custom_call.1} parent=11 // pred_check_branch
          %212 = sbr.rel (%p210) target = $region20
        $region19: #{tpu_custom_call.1} parent=11 // pred_region
          _
        $region20: #{tpu_custom_call.1} parent=11 // pred_fallthru
          _
      $region12: #{tpu_custom_call.1} parent=5 // pred_fallthru
        _
      %p213 = scmp.lt.s32.totalorder %s16, 4
      // Predicated region
      $region21: #{tpu_custom_call.1} parent=5 // pred_check
        %p214 = pneg %p213
      $region22: #{tpu_custom_call.1} parent=5 // pred_check_branch
        %216 = sbr.rel (%p214) target = $region24
      $region23: #{tpu_custom_call.1} parent=5 // pred_region
        // Predicated region
        $region25: #{tpu_custom_call.1} parent=23 // pred_check
          %p217 = pneg %p50
        $region26: #{tpu_custom_call.1} parent=23 // pred_check_branch
          %219 = sbr.rel (%p217) target = $region28
        $region27: #{tpu_custom_call.1} parent=23 // pred_region
          %s220 = sand.u32 %s40, 1
          %s221 = scalar_lea.sflag [#allocation3], %s220
          %s222 = sand.u32 %s40, 1
          %s223 = smul.addr %s222, 8
          %s224 = scalar_lea.vmem [#allocation2], %s223
          %s226 = ssub.s32 128, 128
          %227 = vsyncadd %s221, %s226
          %s228 = smul.addr %s23, 2
          %s229 = sadd.s32 %s24, %s228
          %s230 = smul.addr %s229, 128
          %s231 = scalar_lea.hbm %s0, %s230
          %s233 = sshll.u32 %s224, 4
          %s234 = int_to_ptr.vmem [resolvable:$true] %s233
          %236 = dma.hbm_to_vmem [thread:$0]  %s231, 128, %s234, %s221
        $region28: #{tpu_custom_call.1} parent=23 // pred_fallthru
          _
      $region24: #{tpu_custom_call.1} parent=5 // pred_fallthru
        _
      %p237 = scmp.le.s32.totalorder 1, %s16
      %p238 = scmp.lt.s32.totalorder %s16, 5
      %p239 = pnand %p237, %p238
      %p240 = pneg %p239
      // Predicated region
      $region29: #{tpu_custom_call.1} parent=5 // pred_check
        _
      $region30: #{tpu_custom_call.1} parent=5 // pred_check_branch
        %242 = sbr.rel (%p239) target = $region32
      $region31: #{tpu_custom_call.1} parent=5 // pred_region
        %s243 = ssub.s32 %s16, 1
        %s244 = sand.u32 %s43, 1
        %s245 = scalar_lea.sflag [#allocation3], %s244
        %s246 = sand.u32 %s43, 1
        %s247 = smul.addr %s246, 8
        %s248 = scalar_lea.vmem [#allocation2], %s247
        // Predicated region
        $region33: #{tpu_custom_call.1} parent=31 // pred_check
          %p249 = pneg %p56
        $region34: #{tpu_custom_call.1} parent=31 // pred_check_branch
          %251 = sbr.rel (%p249) target = $region36
        $region35: #{tpu_custom_call.1} parent=31 // pred_region
          %252 = dma.done %s245, 128
        $region36: #{tpu_custom_call.1} parent=31 // pred_fallthru
          _
        // Predicated region
        $region37: #{tpu_custom_call.1} parent=31 // pred_check
          %p253 = pneg %p77
        $region38: #{tpu_custom_call.1} parent=31 // pred_check_branch
          %255 = sbr.rel (%p253) target = $region40
        $region39: #{tpu_custom_call.1} parent=31 // pred_region
          %256 = dma.done [#allocation5], 512
        $region40: #{tpu_custom_call.1} parent=31 // pred_fallthru
          _
        %s257 = sand.u32 %s43, 1
        %s258 = scalar_lea.sflag [#allocation3], %s257
        %s259 = sand.u32 %s43, 1
        %s260 = smul.addr %s259, 8
        %s261 = scalar_lea.vmem [#allocation2], %s260
        %p262 = pneg %p56
        %p263 = pneg %p53
        %p264 = pneg %p77
        %p265 = pneg %p74
        %p266 = pneg %p98
        %p267 = pneg %p95
        %p268 = pneg %p126
        %p269 = pneg %p123
        %s270 = sand.u32 %s113, 1
        %s271 = sand.u32 %s113, 1
        %s272 = smul.addr %s271, 32
        %s273 = scalar_lea.vmem [#allocation6], %s272
        %p274 = pneg %p154
        %p275 = pneg %p151
        %s276 = sand.u32 %s141, 1
        %s277 = sand.u32 %s141, 1
        %s278 = smul.addr %s277, 32
        %s279 = scalar_lea.vmem [#allocation7], %s278
        %p280 = pneg %p182
        %p281 = pneg %p179
        %s282 = sand.u32 %s169, 1
        %s283 = sand.u32 %s169, 1
        %s284 = smul.addr %s283, 32
        %s285 = scalar_lea.vmem [#allocation8], %s284
        %v286 = vld [vmem:[%s248] sm:$0xff]
        %v287 = vld [vmem:[#allocation4] sm:$0xff]
        %v288 = vld [vmem:[#allocation4 + $0x8] sm:$0xff]
        %v289 = vld [vmem:[#allocation4 + $0x10] sm:$0xff]
        %v290 = vld [vmem:[#allocation4 + $0x18] sm:$0xff]
        %v291 = vld [vmem:[%s2] sm:$0x1]
        %v293 = vlaneseq
        %v294 = vshrl.u32 %v293, 7
        %v295 = vsub.s32 0, %v294
        %v296 = vrot.slane %v291, %v295
        %vm298 = vcmask 261120
        %v300 = vsel %vm298, %v286, 0
        %302 = vmatprep.subr.mxu0 0.0
        %303 = vmatpush1.msra.mxu0 %v287
        %304 = vmatprep.subr.mxu0 0.0
        %305 = vmatpush1.msra.mxu0 %v288
        %306 = vmatprep.subr.mxu0 0.0
        %307 = vmatpush1.msra.mxu0 %v289
        %308 = vmatprep.subr.mxu0 0.0
        %309 = vmatpush1.msra.mxu0 %v290
        %310 = vmatprep.subr.mxu0 0.0
        %311 = vmatpush1.msra.mxu0 0.0
        %312 = vmatprep.subr.mxu0 0.0
        %313 = vmatpush1.msra.mxu0 0.0
        %314 = vmatprep.subr.mxu0 0.0
        %315 = vmatpush1.msra.mxu0 0.0
        %316 = vmatprep.subr.mxu0 0.0
        %317 = vmatpush1.msra.mxu0 0.0
        %318 = vmatprep.subr.mxu0 0.0
        %319 = vmatpush1.msra.mxu0 0.0
        %320 = vmatprep.subr.mxu0 0.0
        %321 = vmatpush1.msra.mxu0 0.0
        %322 = vmatprep.subr.mxu0 0.0
        %323 = vmatpush1.msra.mxu0 0.0
        %324 = vmatprep.subr.mxu0 0.0
        %325 = vmatpush1.msra.mxu0 0.0
        %326 = vmatprep.subr.mxu0 0.0
        %327 = vmatpush1.msra.mxu0 0.0
        %328 = vmatprep.subr.mxu0 0.0
        %329 = vmatpush1.msra.mxu0 0.0
        %330 = vmatprep.subr.mxu0 0.0
        %331 = vmatpush1.msra.mxu0 0.0
        %332 = vmatprep.subr.mxu0 0.0
        %333 = vmatpush1.msra.mxu0 0.0
        %334 = vmatprep.subr.mxu0 0.0
        %335 = vmatpush1.msra.mxu0 0.0
        %336 = vmatprep.subr.mxu0 0.0
        %337 = vmatpush1.msra.mxu0 0.0
        %338 = vmatprep.subr.mxu0 0.0
        %339 = vmatpush1.msra.mxu0 0.0
        %340 = vmatprep.subr.mxu0 0.0
        %341 = vmatpush1.msra.mxu0 0.0
        %342 = vmatprep.subr.mxu0 0.0
        %343 = vmatpush1.msra.mxu0 0.0
        %344 = vmatprep.subr.mxu0 0.0
        %345 = vmatpush1.msra.mxu0 0.0
        %346 = vmatprep.subr.mxu0 0.0
        %347 = vmatpush1.msra.mxu0 0.0
        %348 = vmatprep.subr.mxu0 0.0
        %349 = vmatpush1.msra.mxu0 0.0
        %350 = vmatprep.subr.mxu0 0.0
        %351 = vmatpush1.msra.mxu0 0.0
        %352 = vmatprep.subr.mxu0 0.0
        %353 = vmatpush1.msra.mxu0 0.0
        %354 = vmatprep.subr.mxu0 0.0
        %355 = vmatpush1.msra.mxu0 0.0
        %356 = vmatprep.subr.mxu0 0.0
        %357 = vmatpush1.msra.mxu0 0.0
        %358 = vmatprep.subr.mxu0 0.0
        %359 = vmatpush1.msra.mxu0 0.0
        %360 = vmatprep.subr.mxu0 0.0
        %361 = vmatpush1.msra.mxu0 0.0
        %362 = vmatprep.subr.mxu0 0.0
        %363 = vmatpush1.msra.mxu0 0.0
        %364 = vmatprep.subr.mxu0 0.0
        %365 = vmatpush1.msra.mxu0 0.0
        %366 = vmatprep.mubr.f32.mxu0 0.0
        %367 = vmatmul.mubr.f32.gmra.mrb[0].mxu0 %v300
        %v368 = vpop.f32.mrb[0].mxu0
        %v369 = vadd.f32 %v296, %v368
        %v370 = vpop.f32.mrb[0].mxu0
        %371 = vdwg.mxu0
        %v372 = vmul.f32 %v369, 0.5100697
        %vm373 = vcmask 64512
        %374 = vst.msk [vmem:[%s273] sm:$0xff] %vm373, %v372
        %376 = vrot.lane.b32.xlu0 %v369, 96
        %v377 = vpop.permute.xlu0 %376
        %379 = vst.msk [vmem:[%s279] sm:$0xff] %vm373, %v377
        %380 = vrot.lane.b32.xlu0 %v369, 64
        %v381 = vpop.permute.xlu0 %380
        %383 = vst.msk [vmem:[%s285] sm:$0xff] %vm373, %v381
        %385 = vrot.lane.b32.xlu0 %v372, 120
        %v386 = vpop.permute.xlu0 %385
        %s388 = scalar_lea.vmem %s273, 8 [#allocation6]
        %389 = vst.msk [vmem:[%s388] sm:$0xff] %vm373, %v386
        %390 = vrot.lane.b32.xlu0 %v369, 88
        %v391 = vpop.permute.xlu0 %390
        %s393 = scalar_lea.vmem %s279, 8 [#allocation7]
        %394 = vst.msk [vmem:[%s393] sm:$0xff] %vm373, %v391
        %395 = vrot.lane.b32.xlu0 %v369, 56
        %v396 = vpop.permute.xlu0 %395
        %s398 = scalar_lea.vmem %s285, 8 [#allocation8]
        %399 = vst.msk [vmem:[%s398] sm:$0xff] %vm373, %v396
        %400 = vrot.lane.b32.xlu0 %v372, 112
        %v401 = vpop.permute.xlu0 %400
        %s403 = scalar_lea.vmem %s273, 16 [#allocation6]
        %404 = vst.msk [vmem:[%s403] sm:$0xff] %vm373, %v401
        %405 = vrot.lane.b32.xlu0 %v369, 80
        %v406 = vpop.permute.xlu0 %405
        %s408 = scalar_lea.vmem %s279, 16 [#allocation7]
        %409 = vst.msk [vmem:[%s408] sm:$0xff] %vm373, %v406
        %410 = vrot.lane.b32.xlu0 %v369, 48
        %v411 = vpop.permute.xlu0 %410
        %s413 = scalar_lea.vmem %s285, 16 [#allocation8]
        %414 = vst.msk [vmem:[%s413] sm:$0xff] %vm373, %v411
        %415 = vrot.lane.b32.xlu0 %v372, 104
        %v416 = vpop.permute.xlu0 %415
        %s418 = scalar_lea.vmem %s273, 24 [#allocation6]
        %419 = vst.msk [vmem:[%s418] sm:$0xff] %vm373, %v416
        %420 = vrot.lane.b32.xlu0 %v369, 72
        %v421 = vpop.permute.xlu0 %420
        %s423 = scalar_lea.vmem %s279, 24 [#allocation7]
        %424 = vst.msk [vmem:[%s423] sm:$0xff] %vm373, %v421
        %425 = vrot.lane.b32.xlu0 %v369, 40
        %v426 = vpop.permute.xlu0 %425
        %s428 = scalar_lea.vmem %s285, 24 [#allocation8]
        %429 = vst.msk [vmem:[%s428] sm:$0xff] %vm373, %v426
        %s430 = sand.u32 %s113, 1
        %s431 = sand.u32 %s113, 1
        %s432 = smul.addr %s431, 32
        %s433 = scalar_lea.vmem [#allocation6], %s432
        %s434 = sand.u32 %s141, 1
        %s435 = sand.u32 %s141, 1
        %s436 = smul.addr %s435, 32
        %s437 = scalar_lea.vmem [#allocation7], %s436
        %s438 = sand.u32 %s169, 1
        %s439 = sand.u32 %s169, 1
        %s440 = smul.addr %s439, 32
        %s441 = scalar_lea.vmem [#allocation8], %s440
        // Predicated region
        $region41: #{tpu_custom_call.1} parent=31 // pred_check
          %p442 = pneg %p123
        $region42: #{tpu_custom_call.1} parent=31 // pred_check_branch
          %444 = sbr.rel (%p442) target = $region44
        $region43: #{tpu_custom_call.1} parent=31 // pred_region
          %s445 = smul.addr %s25, 8
          %s446 = sadd.s32 %s26, %s445
          %s447 = smul.addr %s446, 8
          %s448 = scalar_lea.vmem %s3, %s447
          // Predicated region
          $region45: #{tpu_custom_call.1} parent=43 // pred_check
            _
          $region46: #{tpu_custom_call.1} parent=43 // pred_check_branch
            %450 = sbr.rel (0) target = $region48
          $region47: #{tpu_custom_call.1} parent=43 // pred_region
            // Predicated region
            $region49: #{tpu_custom_call.1} parent=47 // pred_check
              _
            $region50: #{tpu_custom_call.1} parent=47 // pred_check_branch
              %452 = sbr.rel (0) target = $region52
            $region51: #{tpu_custom_call.1} parent=47 // pred_region
              // Predicated region
              $region64: #{tpu_custom_call.1} parent=51 // pred_check
                _
              $region65: #{tpu_custom_call.1} parent=51 // pred_check_branch
                %473 = sbr.rel (0) target = $region67
              $region66: #{tpu_custom_call.1} parent=51 // pred_region
                loop: start=0, step=1, limit=1
                $region68: #{tpu_custom_call.1} parent=66 // loop_pre_header
                  _
                $region69: #{tpu_custom_call.1} parent=66 // loop_header
                  %s475 = sphi 0, %s479
                  %p476 = scmp.ge.s32.totalorder %s475, 1
                  %s480 = sphi %s433, %s433
                  %s481 = sphi %s448, %s448
                $region70: #{tpu_custom_call.1} parent=66 // loop_header_branch
                  %478 = sbr.rel (%p476) target = $region74
                $region71: #{tpu_custom_call.1} parent=66 // loop_body
                  %v482 = vld [vmem:[%s480] sm:$0xff]
                  %483 = vst [vmem:[%s481] sm:$0xff] %v482
                  %v484 = vld [vmem:[%s480 + $0x8] sm:$0xff]
                  %485 = vst [vmem:[%s481 + $0x10] sm:$0xff] %v484
                  %v486 = vld [vmem:[%s480 + $0x10] sm:$0xff]
                  %487 = vst [vmem:[%s481 + $0x20] sm:$0xff] %v486
                  %v488 = vld [vmem:[%s480 + $0x18] sm:$0xff]
                  %489 = vst [vmem:[%s481 + $0x30] sm:$0xff] %v488
                $region72: #{tpu_custom_call.1} parent=66 // loop_footer
                  %s479 = sadd.s32 1, %s475
                $region73: #{tpu_custom_call.1} parent=66 // loop_footer_branch
                  %474 = sbr.rel target = $region69
                $region74: #{tpu_custom_call.1} parent=66 // loop_exit
                  _
              $region67: #{tpu_custom_call.1} parent=51 // pred_fallthru
                _
              // Predicated region
              $region75: #{tpu_custom_call.1} parent=51 // pred_check
                _
              $region76: #{tpu_custom_call.1} parent=51 // pred_check_branch
                %491 = sbr.rel target = $region78
              $region77: #{tpu_custom_call.1} parent=51 // pred_region
                _
              $region78: #{tpu_custom_call.1} parent=51 // pred_fallthru
                _
            $region52: #{tpu_custom_call.1} parent=47 // pred_fallthru
              _
            // Predicated region
            $region53: #{tpu_custom_call.1} parent=47 // pred_check
              _
            $region54: #{tpu_custom_call.1} parent=47 // pred_check_branch
              %454 = sbr.rel target = $region56
            $region55: #{tpu_custom_call.1} parent=47 // pred_region
              loop: start=0, step=1, limit=1
              $region57: #{tpu_custom_call.1} parent=55 // loop_pre_header
                _
              $region58: #{tpu_custom_call.1} parent=55 // loop_header
                %s457 = sphi 0, %s461
                %p458 = scmp.ge.s32.totalorder %s457, 1
                %s462 = sphi %s433, %s433
                %s463 = sphi %s448, %s448
              $region59: #{tpu_custom_call.1} parent=55 // loop_header_branch
                %460 = sbr.rel (%p458) target = $region63
              $region60: #{tpu_custom_call.1} parent=55 // loop_body
                %v464 = vld [vmem:[%s462] sm:$0xff]
                %465 = vst [vmem:[%s463] sm:$0xff] %v464
                %v466 = vld [vmem:[%s462 + $0x8] sm:$0xff]
                %467 = vst [vmem:[%s463 + $0x10] sm:$0xff] %v466
                %v468 = vld [vmem:[%s462 + $0x10] sm:$0xff]
                %469 = vst [vmem:[%s463 + $0x20] sm:$0xff] %v468
                %v470 = vld [vmem:[%s462 + $0x18] sm:$0xff]
                %471 = vst [vmem:[%s463 + $0x30] sm:$0xff] %v470
              $region61: #{tpu_custom_call.1} parent=55 // loop_footer
                %s461 = sadd.s32 1, %s457
              $region62: #{tpu_custom_call.1} parent=55 // loop_footer_branch
                %456 = sbr.rel target = $region58
              $region63: #{tpu_custom_call.1} parent=55 // loop_exit
                _
            $region56: #{tpu_custom_call.1} parent=47 // pred_fallthru
              _
          $region48: #{tpu_custom_call.1} parent=43 // pred_fallthru
            _
          %492 = vnop
        $region44: #{tpu_custom_call.1} parent=31 // pred_fallthru
          _
        // Predicated region
        $region79: #{tpu_custom_call.1} parent=31 // pred_check
          %p493 = pneg %p151
        $region80: #{tpu_custom_call.1} parent=31 // pred_check_branch
          %495 = sbr.rel (%p493) target = $region82
        $region81: #{tpu_custom_call.1} parent=31 // pred_region
          %s496 = smul.addr %s25, 8
          %s497 = sadd.s32 %s26, %s496
          %s498 = smul.addr %s497, 8
          %s499 = scalar_lea.vmem %s4, %s498
          // Predicated region
          $region83: #{tpu_custom_call.1} parent=81 // pred_check
            _
          $region84: #{tpu_custom_call.1} parent=81 // pred_check_branch
            %501 = sbr.rel (0) target = $region86
          $region85: #{tpu_custom_call.1} parent=81 // pred_region
            // Predicated region
            $region87: #{tpu_custom_call.1} parent=85 // pred_check
              _
            $region88: #{tpu_custom_call.1} parent=85 // pred_check_branch
              %503 = sbr.rel (0) target = $region90
            $region89: #{tpu_custom_call.1} parent=85 // pred_region
              // Predicated region
              $region102: #{tpu_custom_call.1} parent=89 // pred_check
                _
              $region103: #{tpu_custom_call.1} parent=89 // pred_check_branch
                %524 = sbr.rel (0) target = $region105
              $region104: #{tpu_custom_call.1} parent=89 // pred_region
                loop: start=0, step=1, limit=1
                $region106: #{tpu_custom_call.1} parent=104 // loop_pre_header
                  _
                $region107: #{tpu_custom_call.1} parent=104 // loop_header
                  %s526 = sphi 0, %s530
                  %p527 = scmp.ge.s32.totalorder %s526, 1
                  %s531 = sphi %s437, %s437
                  %s532 = sphi %s499, %s499
                $region108: #{tpu_custom_call.1} parent=104 // loop_header_branch
                  %529 = sbr.rel (%p527) target = $region112
                $region109: #{tpu_custom_call.1} parent=104 // loop_body
                  %v533 = vld [vmem:[%s531] sm:$0xff]
                  %534 = vst [vmem:[%s532] sm:$0xff] %v533
                  %v535 = vld [vmem:[%s531 + $0x8] sm:$0xff]
                  %536 = vst [vmem:[%s532 + $0x10] sm:$0xff] %v535
                  %v537 = vld [vmem:[%s531 + $0x10] sm:$0xff]
                  %538 = vst [vmem:[%s532 + $0x20] sm:$0xff] %v537
                  %v539 = vld [vmem:[%s531 + $0x18] sm:$0xff]
                  %540 = vst [vmem:[%s532 + $0x30] sm:$0xff] %v539
                $region110: #{tpu_custom_call.1} parent=104 // loop_footer
                  %s530 = sadd.s32 1, %s526
                $region111: #{tpu_custom_call.1} parent=104 // loop_footer_branch
                  %525 = sbr.rel target = $region107
                $region112: #{tpu_custom_call.1} parent=104 // loop_exit
                  _
              $region105: #{tpu_custom_call.1} parent=89 // pred_fallthru
                _
              // Predicated region
              $region113: #{tpu_custom_call.1} parent=89 // pred_check
                _
              $region114: #{tpu_custom_call.1} parent=89 // pred_check_branch
                %542 = sbr.rel target = $region116
              $region115: #{tpu_custom_call.1} parent=89 // pred_region
                _
              $region116: #{tpu_custom_call.1} parent=89 // pred_fallthru
                _
            $region90: #{tpu_custom_call.1} parent=85 // pred_fallthru
              _
            // Predicated region
            $region91: #{tpu_custom_call.1} parent=85 // pred_check
              _
            $region92: #{tpu_custom_call.1} parent=85 // pred_check_branch
              %505 = sbr.rel target = $region94
            $region93: #{tpu_custom_call.1} parent=85 // pred_region
              loop: start=0, step=1, limit=1
              $region95: #{tpu_custom_call.1} parent=93 // loop_pre_header
                _
              $region96: #{tpu_custom_call.1} parent=93 // loop_header
                %s508 = sphi 0, %s512
                %p509 = scmp.ge.s32.totalorder %s508, 1
                %s513 = sphi %s437, %s437
                %s514 = sphi %s499, %s499
              $region97: #{tpu_custom_call.1} parent=93 // loop_header_branch
                %511 = sbr.rel (%p509) target = $region101
              $region98: #{tpu_custom_call.1} parent=93 // loop_body
                %v515 = vld [vmem:[%s513] sm:$0xff]
                %516 = vst [vmem:[%s514] sm:$0xff] %v515
                %v517 = vld [vmem:[%s513 + $0x8] sm:$0xff]
                %518 = vst [vmem:[%s514 + $0x10] sm:$0xff] %v517
                %v519 = vld [vmem:[%s513 + $0x10] sm:$0xff]
                %520 = vst [vmem:[%s514 + $0x20] sm:$0xff] %v519
                %v521 = vld [vmem:[%s513 + $0x18] sm:$0xff]
                %522 = vst [vmem:[%s514 + $0x30] sm:$0xff] %v521
              $region99: #{tpu_custom_call.1} parent=93 // loop_footer
                %s512 = sadd.s32 1, %s508
              $region100: #{tpu_custom_call.1} parent=93 // loop_footer_branch
                %507 = sbr.rel target = $region96
              $region101: #{tpu_custom_call.1} parent=93 // loop_exit
                _
            $region94: #{tpu_custom_call.1} parent=85 // pred_fallthru
              _
          $region86: #{tpu_custom_call.1} parent=81 // pred_fallthru
            _
          %543 = vnop
        $region82: #{tpu_custom_call.1} parent=31 // pred_fallthru
          _
        // Predicated region
        $region117: #{tpu_custom_call.1} parent=31 // pred_check
          %p544 = pneg %p179
        $region118: #{tpu_custom_call.1} parent=31 // pred_check_branch
          %546 = sbr.rel (%p544) target = $region120
        $region119: #{tpu_custom_call.1} parent=31 // pred_region
          %s547 = smul.addr %s25, 8
          %s548 = sadd.s32 %s26, %s547
          %s549 = smul.addr %s548, 8
          %s550 = scalar_lea.vmem %s5, %s549
          // Predicated region
          $region121: #{tpu_custom_call.1} parent=119 // pred_check
            _
          $region122: #{tpu_custom_call.1} parent=119 // pred_check_branch
            %552 = sbr.rel (0) target = $region124
          $region123: #{tpu_custom_call.1} parent=119 // pred_region
            // Predicated region
            $region125: #{tpu_custom_call.1} parent=123 // pred_check
              _
            $region126: #{tpu_custom_call.1} parent=123 // pred_check_branch
              %554 = sbr.rel (0) target = $region128
            $region127: #{tpu_custom_call.1} parent=123 // pred_region
              // Predicated region
              $region140: #{tpu_custom_call.1} parent=127 // pred_check
                _
              $region141: #{tpu_custom_call.1} parent=127 // pred_check_branch
                %575 = sbr.rel (0) target = $region143
              $region142: #{tpu_custom_call.1} parent=127 // pred_region
                loop: start=0, step=1, limit=1
                $region144: #{tpu_custom_call.1} parent=142 // loop_pre_header
                  _
                $region145: #{tpu_custom_call.1} parent=142 // loop_header
                  %s577 = sphi 0, %s581
                  %p578 = scmp.ge.s32.totalorder %s577, 1
                  %s582 = sphi %s441, %s441
                  %s583 = sphi %s550, %s550
                $region146: #{tpu_custom_call.1} parent=142 // loop_header_branch
                  %580 = sbr.rel (%p578) target = $region150
                $region147: #{tpu_custom_call.1} parent=142 // loop_body
                  %v584 = vld [vmem:[%s582] sm:$0xff]
                  %585 = vst [vmem:[%s583] sm:$0xff] %v584
                  %v586 = vld [vmem:[%s582 + $0x8] sm:$0xff]
                  %587 = vst [vmem:[%s583 + $0x10] sm:$0xff] %v586
                  %v588 = vld [vmem:[%s582 + $0x10] sm:$0xff]
                  %589 = vst [vmem:[%s583 + $0x20] sm:$0xff] %v588
                  %v590 = vld [vmem:[%s582 + $0x18] sm:$0xff]
                  %591 = vst [vmem:[%s583 + $0x30] sm:$0xff] %v590
                $region148: #{tpu_custom_call.1} parent=142 // loop_footer
                  %s581 = sadd.s32 1, %s577
                $region149: #{tpu_custom_call.1} parent=142 // loop_footer_branch
                  %576 = sbr.rel target = $region145
                $region150: #{tpu_custom_call.1} parent=142 // loop_exit
                  _
              $region143: #{tpu_custom_call.1} parent=127 // pred_fallthru
                _
              // Predicated region
              $region151: #{tpu_custom_call.1} parent=127 // pred_check
                _
              $region152: #{tpu_custom_call.1} parent=127 // pred_check_branch
                %593 = sbr.rel target = $region154
              $region153: #{tpu_custom_call.1} parent=127 // pred_region
                _
              $region154: #{tpu_custom_call.1} parent=127 // pred_fallthru
                _
            $region128: #{tpu_custom_call.1} parent=123 // pred_fallthru
              _
            // Predicated region
            $region129: #{tpu_custom_call.1} parent=123 // pred_check
              _
            $region130: #{tpu_custom_call.1} parent=123 // pred_check_branch
              %556 = sbr.rel target = $region132
            $region131: #{tpu_custom_call.1} parent=123 // pred_region
              loop: start=0, step=1, limit=1
              $region133: #{tpu_custom_call.1} parent=131 // loop_pre_header
                _
              $region134: #{tpu_custom_call.1} parent=131 // loop_header
                %s559 = sphi 0, %s563
                %p560 = scmp.ge.s32.totalorder %s559, 1
                %s564 = sphi %s441, %s441
                %s565 = sphi %s550, %s550
              $region135: #{tpu_custom_call.1} parent=131 // loop_header_branch
                %562 = sbr.rel (%p560) target = $region139
              $region136: #{tpu_custom_call.1} parent=131 // loop_body
                %v566 = vld [vmem:[%s564] sm:$0xff]
                %567 = vst [vmem:[%s565] sm:$0xff] %v566
                %v568 = vld [vmem:[%s564 + $0x8] sm:$0xff]
                %569 = vst [vmem:[%s565 + $0x10] sm:$0xff] %v568
                %v570 = vld [vmem:[%s564 + $0x10] sm:$0xff]
                %571 = vst [vmem:[%s565 + $0x20] sm:$0xff] %v570
                %v572 = vld [vmem:[%s564 + $0x18] sm:$0xff]
                %573 = vst [vmem:[%s565 + $0x30] sm:$0xff] %v572
              $region137: #{tpu_custom_call.1} parent=131 // loop_footer
                %s563 = sadd.s32 1, %s559
              $region138: #{tpu_custom_call.1} parent=131 // loop_footer_branch
                %558 = sbr.rel target = $region134
              $region139: #{tpu_custom_call.1} parent=131 // loop_exit
                _
            $region132: #{tpu_custom_call.1} parent=123 // pred_fallthru
              _
          $region124: #{tpu_custom_call.1} parent=119 // pred_fallthru
            _
          %594 = vnop
        $region120: #{tpu_custom_call.1} parent=31 // pred_fallthru
          _
      $region32: #{tpu_custom_call.1} parent=5 // pred_fallthru
        _
      %p595 = scmp.le.s32.totalorder 2, %s16
      // Predicated region
      $region155: #{tpu_custom_call.1} parent=5 // pred_check
        %p596 = pneg %p595
      $region156: #{tpu_custom_call.1} parent=5 // pred_check_branch
        %598 = sbr.rel (%p596) target = $region158
      $region157: #{tpu_custom_call.1} parent=5 // pred_region
        %s599 = ssub.s32 %s16, 2
        // Predicated region
        $region159: #{tpu_custom_call.1} parent=157 // pred_check
          %p600 = pneg %p129
        $region160: #{tpu_custom_call.1} parent=157 // pred_check_branch
          %602 = sbr.rel (%p600) target = $region162
        $region161: #{tpu_custom_call.1} parent=157 // pred_region
          %s603 = sand.u32 %s114, 1
          %s604 = sand.u32 %s114, 1
          %s605 = smul.addr %s604, 32
          %s606 = scalar_lea.vmem [#allocation6], %s605
        $region162: #{tpu_custom_call.1} parent=157 // pred_fallthru
          _
        // Predicated region
        $region163: #{tpu_custom_call.1} parent=157 // pred_check
          %p607 = pneg %p157
        $region164: #{tpu_custom_call.1} parent=157 // pred_check_branch
          %609 = sbr.rel (%p607) target = $region166
        $region165: #{tpu_custom_call.1} parent=157 // pred_region
          %s610 = sand.u32 %s142, 1
          %s611 = sand.u32 %s142, 1
          %s612 = smul.addr %s611, 32
          %s613 = scalar_lea.vmem [#allocation7], %s612
        $region166: #{tpu_custom_call.1} parent=157 // pred_fallthru
          _
        // Predicated region
        $region167: #{tpu_custom_call.1} parent=157 // pred_check
          %p614 = pneg %p185
        $region168: #{tpu_custom_call.1} parent=157 // pred_check_branch
          %616 = sbr.rel (%p614) target = $region170
        $region169: #{tpu_custom_call.1} parent=157 // pred_region
          %s617 = sand.u32 %s170, 1
          %s618 = sand.u32 %s170, 1
          %s619 = smul.addr %s618, 32
          %s620 = scalar_lea.vmem [#allocation8], %s619
        $region170: #{tpu_custom_call.1} parent=157 // pred_fallthru
          _
      $region158: #{tpu_custom_call.1} parent=5 // pred_fallthru
        _
    $region6: #{tpu_custom_call.1} parent=1 // loop_footer
      %s20 = sadd.s32 1, %s16
    $region7: #{tpu_custom_call.1} parent=1 // loop_footer_branch
      %15 = sbr.rel target = $region3
    $region8: #{tpu_custom_call.1} parent=1 // loop_exit
      _
    %621 = vsyncpa [#allocation3], 1
    %s622 = scalar_lea.sflag [#allocation3], 1
    %623 = vsyncpa %s622, 1
    %624 = vsyncpa [#allocation5], 1

</llo_original>
